<compile_context>
chip_gen: v7x
topology: tpu7x:2x2x1
jax: 0.10.0
libtpu: 0.0.40
codegen_flags: <defaults>
</compile_context>

<pallas_src>
import functools

import jax
import jax.numpy as jnp
from jax.experimental import pallas as pl
from jax.experimental.pallas import tpu as pltpu


def _round_up(x, m):
    return ((x + m - 1) // m) * m


def _cdiv(a, b):
    return (a + b - 1) // b


def _is_v7x():
    try:
        return "v7" in jax.devices()[0].device_kind.lower()
    except Exception:
        return False


def _xla_forward(target, pred_rel_emb, mask, rel_weight):
    """Reference / fallback: exactly the PyTorch module's math."""
    d = target.astype(jnp.float32) - pred_rel_emb.astype(jnp.float32)
    per_row = jnp.sum(d * d, axis=-1)
    return jnp.sum(per_row * rel_weight.astype(jnp.float32) * mask.astype(jnp.float32))


def _l2_kernel(exp_ref, t_ref, p_ref, w_ref, o_ref, acc_ref, *,
               tile, steps, total_rows, full_blocks, group, use_dot, needs_mask):
    c = pl.program_id(0)          # chunk (TensorCore on v7x)
    i = pl.program_id(1)          # row-tile step within the chunk

    @pl.when(i == 0)
    def _():
        acc_ref[...] = jnp.zeros_like(acc_ref)

    t = t_ref[...].astype(jnp.float32)
    p = p_ref[...].astype(jnp.float32)
    d = t - p
    d2 = d * d                                             # (tile, 128)

    w = w_ref[...].astype(jnp.float32)                     # (tile, G_k)
    if group == 1:
        w_exp = w                                          # (tile, 1): lane broadcast
    elif use_dot:
        # Constant 0/1 expansion matrix on the (idle) MXU: (tile,G_k)@(G_k,128).
        w_exp = jnp.dot(w, exp_ref[...], preferred_element_type=jnp.float32)
    else:
        # Tiny-tile fallback: G one-hot multiply-adds on the VPU.
        e = exp_ref[...]
        w_exp = w[:, 0:1] * e[0:1, :]
        for g in range(1, group):
            w_exp = w_exp + w[:, g:g + 1] * e[g:g + 1, :]

    if needs_mask:
        b = c * steps + i                                  # global block index

        @pl.when(b < full_blocks)                          # steady state: no mask cost
        def _():
            acc_ref[...] += d2 * w_exp

        @pl.when(b >= full_blocks)                         # partial / padding blocks
        def _():
            row = jax.lax.broadcasted_iota(jnp.int32, d2.shape, 0)
            valid = (b * tile + row) < total_rows
            # Mask d2 itself (not only the weight): stale VMEM rows of a partial
            # block may hold NaN/Inf and 0*NaN = NaN.
            acc_ref[...] += jnp.where(valid, d2, 0.0) * w_exp
    else:
        acc_ref[...] += d2 * w_exp

    @pl.when(i == steps - 1)
    def _():
        o_ref[0, 0] = jnp.sum(acc_ref[...])                # single final reduction


def l2_criterion(target, pred_rel_emb, mask, rel_weight, *,
                 row_tile=4096, num_chunks=None, min_pallas_rows=4096):
    """Pallas equivalent of L2Criterion.forward -> scalar float32."""
    B, N, D = target.shape
    M = B * N

    # ---- copy-free lane-dense repacking plan ---------------------------------
    is_pow2 = D > 0 and (D & (D - 1)) == 0
    if D % 128 == 0:
        reps, G = D // 128, 1                    # each row -> `reps` dense rows
        repackable = True
    elif is_pow2 and D < 128 and M % (128 // D) == 0:
        reps, G = 1, 128 // D                    # `G` rows packed per dense row
        repackable = True
    else:
        reps, G = 1, 1
        repackable = False
    R = (M * D) // 128 if repackable else 0      # dense 128-lane rows

    if (not repackable) or R < min_pallas_rows:
        # Tiny inputs (all launch/step overhead) or shapes that would require a
        # full pad-copy of the big tensors: the fused XLA reduction is already
        # HBM-bound and cheaper.
        # TODO(synk): strided-DMA Pallas path for D that is neither a power of
        # two (<128) nor a multiple of 128.
        return _xla_forward(target, pred_rel_emb, mask, rel_weight)

    if num_chunks is None:
        # TODO(synk): confirm on a v7x profile that the "parallel" leading axis
        # lands one chunk per TensorCore; otherwise switch to CORE_PARALLEL.
        num_chunks = 2 if _is_v7x() else 1

    # ---- big tensors: reshape only (contiguous -> free), never padded --------
    t_d = target.reshape(R, 128)
    p_d = pred_rel_emb.reshape(R, 128)

    # ---- tiny per-row weight stream: mask * rel_weight fused (O(M)) ----------
    wm = (rel_weight.astype(jnp.float32) * mask.astype(jnp.float32)).reshape(M)
    if G == 1:
        w_d = (jnp.repeat(wm, reps) if reps > 1 else wm).reshape(R, 1)
        G_k = 1
    else:
        G_k = max(G, 8)                          # pad contraction dim to a sublane
        w_d = wm.reshape(R, G)
        if G_k != G:
            w_d = jnp.pad(w_d, ((0, 0), (0, G_k - G)))

    # Constant 0/1 lane-group expansion matrix (stays resident in VMEM, ~4 KiB).
    if G > 1:
        lane_grp = jnp.arange(128, dtype=jnp.int32) // D
        expand = (lane_grp[None, :] ==
                  jnp.arange(G_k, dtype=jnp.int32)[:, None]).astype(jnp.float32)
    else:
        expand = jnp.ones((1, 128), jnp.float32)          # placeholder (unused)

    # ---- row tiling (no padding of t/p; partial last tile masked in-kernel) --
    sub = {4: 8, 2: 16, 1: 32}.get(target.dtype.itemsize, 8)
    if R <= sub:
        tile = R                                          # block == full array dim
    else:
        tile = min(row_tile, _round_up(_cdiv(R, num_chunks), sub))
        tile = max(sub, min(tile, (R // sub) * sub))      # multiple of sub, <= R
    nb_real = _cdiv(R, tile)                              # blocks touching real rows
    num_chunks = max(1, min(num_chunks, nb_real))
    steps = _cdiv(nb_real, num_chunks)
    nb = num_chunks * steps                               # total grid blocks
    full_blocks = R // tile                               # blocks with only valid rows
    needs_mask = (nb * tile != R)

    # Only the small weight array gets row padding (zeros => zero contribution).
    if nb * tile != R:
        w_d = jnp.pad(w_d, ((0, nb * tile - R), (0, 0)))

    if needs_mask:
        # Fully-out-of-range grid blocks re-read the last real block (safe DMA);
        # their rows are masked to zero inside the kernel.
        tp_map = lambda c, i: (jnp.minimum(c * steps + i, nb_real - 1), 0)
    else:
        tp_map = lambda c, i: (c * steps + i, 0)
    w_map = lambda c, i: (c * steps + i, 0)

    kernel = functools.partial(
        _l2_kernel, tile=tile, steps=steps, total_rows=R,
        full_blocks=full_blocks, group=G, use_dot=(G > 1 and tile >= 8),
        needs_mask=needs_mask)

    itemsize = target.dtype.itemsize
    cost = pl.CostEstimate(
        flops=4 * M * D, transcendentals=0,
        bytes_accessed=2 * M * D * itemsize + (M + nb * tile * G_k) * 4 + 4)

    partials = pl.pallas_call(
        kernel,
        out_shape=jax.ShapeDtypeStruct((num_chunks, 1), jnp.float32),
        grid_spec=pltpu.PrefetchScalarGridSpec(
            num_scalar_prefetch=0,
            grid=(num_chunks, steps),
            in_specs=[
                pl.BlockSpec(expand.shape, lambda c, i: (0, 0)),  # resident const
                pl.BlockSpec((tile, 128), tp_map),                # target (dense)
                pl.BlockSpec((tile, 128), tp_map),                # pred (dense)
                pl.BlockSpec((tile, G_k), w_map),                 # fused weights
            ],
            out_specs=pl.BlockSpec((1, 1), lambda c, i: (c, 0),
                                   memory_space=pltpu.MemorySpace.SMEM),
            scratch_shapes=[pltpu.VMEM((tile, 128), jnp.float32)],
        ),
        compiler_params=pltpu.CompilerParams(
            dimension_semantics=("parallel", "arbitrary"),
            vmem_limit_bytes=32 * 1024 * 1024,
        ),
        cost_estimate=cost,
    )(expand, t_d, p_d, w_d)

    # One partial per chunk (per TensorCore on v7x); tiny final sum in XLA.
    return jnp.sum(partials)


if __name__ == "__main__":
    key = jax.random.PRNGKey(0)
    k1, k2, k3, k4 = jax.random.split(key, 4)

    # Small shapes implied by the module: (batch, seq, hidden) embeddings and
    # (batch, seq) mask / rel_weight.
    B, N, D = 2, 8, 32
    target = jax.random.normal(k1, (B, N, D), dtype=jnp.float32)
    pred_rel_emb = jax.random.normal(k2, (B, N, D), dtype=jnp.float32)
    mask = (jax.random.uniform(k3, (B, N)) > 0.3).astype(jnp.float32)
    rel_weight = jax.random.uniform(k4, (B, N), dtype=jnp.float32)

    out = l2_criterion(target, pred_rel_emb, mask, rel_weight,
                       min_pallas_rows=0)              # force the Pallas path
    out = jax.block_until_ready(out)
    ref = _xla_forward(target, pred_rel_emb, mask, rel_weight)
    assert jnp.allclose(out, ref, rtol=1e-4, atol=1e-3), (out, ref)

    # Multi-step path: exercises the MXU weight expansion (G=2) over several tiles.
    B2, N2, D2 = 4, 512, 64
    t2 = jax.random.normal(k1, (B2, N2, D2), dtype=jnp.float32)
    p2 = jax.random.normal(k2, (B2, N2, D2), dtype=jnp.float32)
    m2 = (jax.random.uniform(k3, (B2, N2)) > 0.5).astype(jnp.float32)
    w2 = jax.random.uniform(k4, (B2, N2), dtype=jnp.float32)
    out2 = jax.block_until_ready(
        l2_criterion(t2, p2, m2, w2, min_pallas_rows=0, row_tile=256))
    ref2 = _xla_forward(t2, p2, m2, w2)
    assert jnp.allclose(out2, ref2, rtol=1e-4, atol=1e-3), (out2, ref2)

    # Ragged row count: exercises the in-kernel partial-tile masking (G=1).
    B3, N3, D3 = 3, 333, 128
    t3 = jax.random.normal(k1, (B3, N3, D3), dtype=jnp.float32)
    p3 = jax.random.normal(k2, (B3, N3, D3), dtype=jnp.float32)
    m3 = (jax.random.uniform(k3, (B3, N3)) > 0.5).astype(jnp.float32)
    w3 = jax.random.uniform(k4, (B3, N3), dtype=jnp.float32)
    out3 = jax.block_until_ready(
        l2_criterion(t3, p3, m3, w3, min_pallas_rows=0, row_tile=128))
    ref3 = _xla_forward(t3, p3, m3, w3)
    assert jnp.allclose(out3, ref3, rtol=1e-4, atol=1e-3), (out3, ref3)

    print("KERNEL_OK")
</pallas_src>

<mosaic_0001>
module attributes {stable_mosaic.version = 11 : i64} {
  func.func @_l2_kernel(%arg0: i32, %arg1: i32, %arg2: memref<8x128xf32, #tpu.memory_space<vmem>>, %arg3: memref<4x128xf32, #tpu.memory_space<vmem>>, %arg4: memref<4x128xf32, #tpu.memory_space<vmem>>, %arg5: memref<4x8xf32, #tpu.memory_space<vmem>>, %arg6: memref<1x1xf32, #tpu.memory_space<smem>>, %arg7: memref<4x128xf32, #tpu.memory_space<vmem>>) attributes {dimension_semantics = [#tpu.dimension_semantics<parallel>, #tpu.dimension_semantics<arbitrary>], iteration_bounds = array<i64: 1, 1>, scalar_prefetch = 0 : i64, scratch_operands = 1 : i64, tpu.core_type = #tpu.core_type<tc>, window_params = [{pipeline_mode = #tpu.pipeline_mode<synchronous>, transform_indices = @transform_0, window_bounds = array<i64: 8, 128>}, {transform_indices = @transform_1, window_bounds = array<i64: 4, 128>}, {transform_indices = @transform_2, window_bounds = array<i64: 4, 128>}, {transform_indices = @transform_3, window_bounds = array<i64: 4, 8>}, {transform_indices = @transform_4, window_bounds = array<i64: 1, 1>}]} {
    %c0_i32 = arith.constant 0 : i32
    %0 = arith.cmpi eq, %arg1, %c0_i32 : i32
    %1 = arith.extui %0 : i1 to i32
    %c0_i32_0 = arith.constant 0 : i32
    %2 = arith.cmpi ne, %1, %c0_i32_0 : i32
    scf.if %2 {
      %cst = arith.constant 0.000000e+00 : f32
      %39 = vector.broadcast %cst : f32 to vector<4x128xf32>
      %c0_14 = arith.constant 0 : index
      %c0_15 = arith.constant 0 : index
      %40 = vector.load %arg7[%c0_14, %c0_15] : memref<4x128xf32, #tpu.memory_space<vmem>>, vector<4x128xf32>
      tpu.vector_store %arg7[%c0_14, %c0_15], %39 {strides = array<i32>} : memref<4x128xf32, #tpu.memory_space<vmem>>, vector<4x128xf32>,
    } else {
    }
    %c0 = arith.constant 0 : index
    %c0_1 = arith.constant 0 : index
    %3 = vector.load %arg3[%c0, %c0_1] : memref<4x128xf32, #tpu.memory_space<vmem>>, vector<4x128xf32>
    %c0_2 = arith.constant 0 : index
    %c0_3 = arith.constant 0 : index
    %4 = vector.load %arg4[%c0_2, %c0_3] : memref<4x128xf32, #tpu.memory_space<vmem>>, vector<4x128xf32>
    %5 = arith.subf %3, %4 : vector<4x128xf32>
    %6 = arith.mulf %5, %5 : vector<4x128xf32>
    %c0_4 = arith.constant 0 : index
    %c0_5 = arith.constant 0 : index
    %7 = vector.load %arg5[%c0_4, %c0_5] : memref<4x8xf32, #tpu.memory_space<vmem>>, vector<4x8xf32>
    %c0_6 = arith.constant 0 : index
    %c0_7 = arith.constant 0 : index
    %8 = vector.load %arg2[%c0_6, %c0_7] : memref<8x128xf32, #tpu.memory_space<vmem>>, vector<8x128xf32>
    %9 = vector.extract_strided_slice %7 {offsets = [0, 0], sizes = [4, 1], strides = [1, 1]} : vector<4x8xf32> to vector<4x1xf32>
    %10 = vector.extract_strided_slice %8 {offsets = [0, 0], sizes = [1, 128], strides = [1, 1]} : vector<8x128xf32> to vector<1x128xf32>
    %11 = vector.broadcast %9 : vector<4x1xf32> to vector<4x128xf32>
    %12 = vector.broadcast %10 : vector<1x128xf32> to vector<4x128xf32>
    %13 = arith.mulf %11, %12 : vector<4x128xf32>
    %14 = vector.extract_strided_slice %7 {offsets = [0, 1], sizes = [4, 1], strides = [1, 1]} : vector<4x8xf32> to vector<4x1xf32>
    %15 = vector.extract_strided_slice %8 {offsets = [1, 0], sizes = [1, 128], strides = [1, 1]} : vector<8x128xf32> to vector<1x128xf32>
    %16 = vector.broadcast %14 : vector<4x1xf32> to vector<4x128xf32>
    %17 = vector.broadcast %15 : vector<1x128xf32> to vector<4x128xf32>
    %18 = arith.mulf %16, %17 : vector<4x128xf32>
    %19 = arith.addf %13, %18 : vector<4x128xf32>
    %20 = vector.extract_strided_slice %7 {offsets = [0, 2], sizes = [4, 1], strides = [1, 1]} : vector<4x8xf32> to vector<4x1xf32>
    %21 = vector.extract_strided_slice %8 {offsets = [2, 0], sizes = [1, 128], strides = [1, 1]} : vector<8x128xf32> to vector<1x128xf32>
    %22 = vector.broadcast %20 : vector<4x1xf32> to vector<4x128xf32>
    %23 = vector.broadcast %21 : vector<1x128xf32> to vector<4x128xf32>
    %24 = arith.mulf %22, %23 : vector<4x128xf32>
    %25 = arith.addf %19, %24 : vector<4x128xf32>
    %26 = vector.extract_strided_slice %7 {offsets = [0, 3], sizes = [4, 1], strides = [1, 1]} : vector<4x8xf32> to vector<4x1xf32>
    %27 = vector.extract_strided_slice %8 {offsets = [3, 0], sizes = [1, 128], strides = [1, 1]} : vector<8x128xf32> to vector<1x128xf32>
    %28 = vector.broadcast %26 : vector<4x1xf32> to vector<4x128xf32>
    %29 = vector.broadcast %27 : vector<1x128xf32> to vector<4x128xf32>
    %30 = arith.mulf %28, %29 : vector<4x128xf32>
    %31 = arith.addf %25, %30 : vector<4x128xf32>
    %c0_8 = arith.constant 0 : index
    %c0_9 = arith.constant 0 : index
    %32 = vector.load %arg7[%c0_8, %c0_9] : memref<4x128xf32, #tpu.memory_space<vmem>>, vector<4x128xf32>
    %33 = arith.mulf %6, %31 : vector<4x128xf32>
    %34 = arith.addf %32, %33 : vector<4x128xf32>
    %c0_10 = arith.constant 0 : index
    %c0_11 = arith.constant 0 : index
    %35 = vector.load %arg7[%c0_10, %c0_11] : memref<4x128xf32, #tpu.memory_space<vmem>>, vector<4x128xf32>
    tpu.vector_store %arg7[%c0_10, %c0_11], %34 {strides = array<i32>} : memref<4x128xf32, #tpu.memory_space<vmem>>, vector<4x128xf32>,
    %c0_i32_12 = arith.constant 0 : i32
    %36 = arith.cmpi eq, %arg1, %c0_i32_12 : i32
    %37 = arith.extui %36 : i1 to i32
    %c0_i32_13 = arith.constant 0 : i32
    %38 = arith.cmpi ne, %37, %c0_i32_13 : i32
    scf.if %38 {
      %c0_14 = arith.constant 0 : index
      %c0_15 = arith.constant 0 : index
      %39 = vector.load %arg7[%c0_14, %c0_15] : memref<4x128xf32, #tpu.memory_space<vmem>>, vector<4x128xf32>
      %40 = vector.shape_cast %39 : vector<4x128xf32> to vector<1x4x128xf32>
      %cst = arith.constant dense<0.000000e+00> : vector<1xf32>
      %41 = vector.multi_reduction <add>, %40, %cst [1, 2] : vector<1x4x128xf32> to vector<1xf32>
      %42 = vector.shape_cast %41 : vector<1xf32> to vector<1x1x1xf32>
      %43 = vector.extract %42[0, 0, 0] : f32 from vector<1x1x1xf32>
      %c0_16 = arith.constant 0 : index
      %c0_17 = arith.constant 0 : index
      %44 = memref.load %arg6[%c0_16, %c0_17] : memref<1x1xf32, #tpu.memory_space<smem>>
      memref.store %43, %arg6[%c0_16, %c0_17] : memref<1x1xf32, #tpu.memory_space<smem>>
    } else {
    }
    return
  }
  func.func @transform_0(%arg0: i32, %arg1: i32) -> (i32, i32) {
    %c0_i32 = arith.constant 0 : i32
    %c0_i32_0 = arith.constant 0 : i32
    %c0_i32_1 = arith.constant 0 : i32
    return %c0_i32, %c0_i32_0 : i32, i32
  }
  func.func @transform_1(%arg0: i32, %arg1: i32) -> (i32, i32) {
    %c1_i32 = arith.constant 1 : i32
    %0 = arith.muli %arg0, %c1_i32 : i32
    %1 = arith.addi %0, %arg1 : i32
    %c0_i32 = arith.constant 0 : i32
    %c0_i32_0 = arith.constant 0 : i32
    return %1, %c0_i32 : i32, i32
  }
  func.func @transform_2(%arg0: i32, %arg1: i32) -> (i32, i32) {
    %c1_i32 = arith.constant 1 : i32
    %0 = arith.muli %arg0, %c1_i32 : i32
    %1 = arith.addi %0, %arg1 : i32
    %c0_i32 = arith.constant 0 : i32
    %c0_i32_0 = arith.constant 0 : i32
    return %1, %c0_i32 : i32, i32
  }
  func.func @transform_3(%arg0: i32, %arg1: i32) -> (i32, i32) {
    %c1_i32 = arith.constant 1 : i32
    %0 = arith.muli %arg0, %c1_i32 : i32
    %1 = arith.addi %0, %arg1 : i32
    %c0_i32 = arith.constant 0 : i32
    %c0_i32_0 = arith.constant 0 : i32
    return %1, %c0_i32 : i32, i32
  }
  func.func @transform_4(%arg0: i32, %arg1: i32) -> (i32, i32) {
    %c0_i32 = arith.constant 0 : i32
    %c0_i32_0 = arith.constant 0 : i32
    return %arg0, %c0_i32 : i32, i32
  }
}

</mosaic_0001>

<llo_original>
// kernel: tpu_custom_call.1
$region0: #{tpu_custom_call.1}
  #allocation0 [shape = 'u32[]', space=smem, size = 0x4, offset = 0x4, fixed_abs, tag = 'smem constant byte address 0x4 - core index']
  #allocation1 [shape = 'u32[144,128]{1,0:T(1,128)}', space=vmem, size = 0x12000, scoped, tag = 'internal scratch']
  #allocation2 [shape = 'f32[4,128]{1,0:T(4,128)}', space=vmem, size = 0x800, scoped, tag = 'scratch operand']
  %s0 = inlined_call_operand.hbm [shape: f32[8,128], index: 0, kind: input, shape index: {}]
  %s1 = inlined_call_operand.hbm [shape: f32[4,128], index: 1, kind: input, shape index: {}]
  %s2 = inlined_call_operand.vmem [shape: f32[4,128], index: 2, kind: input, shape index: {}]
  %s3 = inlined_call_operand.vmem [shape: f32[4,8], index: 3, kind: input, shape index: {}]
  %s4 = inlined_call_operand.hbm [shape: f32[1,1], index: 4, kind: output, shape index: {}]
  %s5 = sld [smem:[#allocation0]]
  $region42: #{tpu_custom_call.1} parent=0
    _
  %s7 = ssub.s32 1, %s5
  %s8 = scalar_select 0, %s7, %s5
  $region1: #{tpu_custom_call.1} parent=0
    #allocation3 [shape = 'u8[4096]{0}', space=vmem, size = 0x1000, scoped, tag = 'input window, operand 0, single buffered']
    #allocation4 [shape = 's32[1]{0}', space=sflag, size = 0x4, scoped, tag = 'scoped memory for tpu_custom_call.1']
    #allocation5 [shape = 's32[1]{0}', space=sflag, size = 0x4, scoped, tag = 'scoped memory for tpu_custom_call.1']
    #allocation6 [shape = 'u8[2048]{0}', space=vmem, size = 0x800, scoped, tag = 'input window, operand 1, single buffered']
    #allocation7 [shape = 's32[1]{0}', space=sflag, size = 0x4, scoped, tag = 'scoped memory for tpu_custom_call.1']
    #allocation8 [shape = 'u8[512]{0}', space=smem, size = 0x200, scoped, tag = 'output window, operand 0, single buffered']
    %9 = vsyncpa [#allocation4], 0
    %10 = vsyncpa [#allocation7], 0
    %11 = vsyncpa [#allocation5], 0
    // Predicated region
    $region2: #{tpu_custom_call.1} parent=1 // pred_check
      _
    $region3: #{tpu_custom_call.1} parent=1 // pred_check_branch
      %13 = sbr.rel (0) target = $region5
    $region4: #{tpu_custom_call.1} parent=1 // pred_region
      %s15 = ssub.s32 128, 128
      %16 = vsyncadd [#allocation4], %s15
      %s18 = sshll.u32 [#allocation3], 4
      %s19 = int_to_ptr.vmem [resolvable:$true] %s18
      %21 = dma.hbm_to_vmem [thread:$0]  %s0, 128, %s19, [#allocation4]
    $region5: #{tpu_custom_call.1} parent=1 // pred_fallthru
      _
    // Predicated region
    $region6: #{tpu_custom_call.1} parent=1 // pred_check
      _
    $region7: #{tpu_custom_call.1} parent=1 // pred_check_branch
      %23 = sbr.rel (0) target = $region9
    $region8: #{tpu_custom_call.1} parent=1 // pred_region
      %s24 = sadd.s32 0, 0
      %s26 = ssub.s32 64, 64
      %27 = vsyncadd [#allocation7], %s26
      %s28 = smul.addr %s24, 64
      %s29 = scalar_lea.hbm %s1, %s28
      %s31 = sshll.u32 [#allocation6], 4
      %s32 = int_to_ptr.vmem [resolvable:$true] %s31
      %34 = dma.hbm_to_vmem [thread:$0]  %s29, 64, %s32, [#allocation7]
    $region9: #{tpu_custom_call.1} parent=1 // pred_fallthru
      _
    // Predicated region
    $region10: #{tpu_custom_call.1} parent=1 // pred_check
      _
    $region11: #{tpu_custom_call.1} parent=1 // pred_check_branch
      %36 = sbr.rel (0) target = $region13
    $region12: #{tpu_custom_call.1} parent=1 // pred_region
      %s37 = sadd.s32 0, 0
      %p38 = scmp.lt.s32.totalorder %s37, 0
      %s39 = scalar_select %p38, %s37, 0
      %s40 = smul.addr %s39, 4
      %s41 = scalar_lea.vmem %s2, %s40
      %s42 = sadd.s32 0, 0
    $region13: #{tpu_custom_call.1} parent=1 // pred_fallthru
      _
    // Predicated region
    $region14: #{tpu_custom_call.1} parent=1 // pred_check
      _
    $region15: #{tpu_custom_call.1} parent=1 // pred_check_branch
      %44 = sbr.rel (0) target = $region17
    $region16: #{tpu_custom_call.1} parent=1 // pred_region
      %s45 = sadd.s32 0, 0
      %p46 = scmp.lt.s32.totalorder %s45, 0
      %s47 = scalar_select %p46, %s45, 0
      %s48 = smul.addr %s47, 4
      %s49 = scalar_lea.vmem %s3, %s48
      %s50 = sadd.s32 0, 0
    $region17: #{tpu_custom_call.1} parent=1 // pred_fallthru
      _
    // Predicated region
    $region18: #{tpu_custom_call.1} parent=1 // pred_check
      _
    $region19: #{tpu_custom_call.1} parent=1 // pred_check_branch
      %52 = sbr.rel (0) target = $region21
    $region20: #{tpu_custom_call.1} parent=1 // pred_region
      %53 = dma.done [#allocation4], 128
    $region21: #{tpu_custom_call.1} parent=1 // pred_fallthru
      _
    // Predicated region
    $region22: #{tpu_custom_call.1} parent=1 // pred_check
      _
    $region23: #{tpu_custom_call.1} parent=1 // pred_check_branch
      %55 = sbr.rel (0) target = $region25
    $region24: #{tpu_custom_call.1} parent=1 // pred_region
      %56 = dma.done [#allocation7], 64
    $region25: #{tpu_custom_call.1} parent=1 // pred_fallthru
      _
    %s57 = sadd.s32 0, 0
    %p58 = scmp.lt.s32.totalorder %s57, 0
    %s59 = scalar_select %p58, %s57, 0
    %s60 = smul.addr %s59, 4
    %s61 = scalar_lea.vmem %s2, %s60
    %s62 = sadd.s32 0, 0
    %p63 = scmp.lt.s32.totalorder %s62, 0
    %s64 = scalar_select %p63, %s62, 0
    %s65 = smul.addr %s64, 4
    %s66 = scalar_lea.vmem %s3, %s65
    %s67 = sadd.s32 0, 0
    %s68 = sadd.s32 0, 0
    %p69 = scmp.lt.s32.totalorder %s68, 0
    %s70 = scalar_select %p69, %s68, 0
    %s71 = smul.addr %s70, 4
    %s72 = scalar_lea.vmem %s2, %s71
    %s73 = sadd.s32 0, 0
    %s74 = sadd.s32 0, 0
    %p75 = scmp.lt.s32.totalorder %s74, 0
    %s76 = scalar_select %p75, %s74, 0
    %s77 = smul.addr %s76, 4
    %s78 = scalar_lea.vmem %s3, %s77
    %s79 = sadd.s32 0, 0
    %p80 = scmp.eq.s32.totalorder 0, 0
    // Predicated region
    $region26: #{tpu_custom_call.1} parent=1 // pred_check
      %p81 = pneg %p80
    $region27: #{tpu_custom_call.1} parent=1 // pred_check_branch
      %83 = sbr.rel (%p81) target = $region29
    $region28: #{tpu_custom_call.1} parent=1 // pred_region
      %84 = vst [vmem:[#allocation2] sm:$0xf] 0.0
    $region29: #{tpu_custom_call.1} parent=1 // pred_fallthru
      _
    %v85 = vld [vmem:[#allocation6] sm:$0xf]
    %v86 = vld [vmem:[%s72] sm:$0xf]
    %v87 = vsub.f32 %v85, %v86
    %v88 = vmul.f32 %v87, %v87
    %v89 = vld [vmem:[%s78] sm:$0xf]
    %v90 = vld [vmem:[#allocation3] sm:$0xff]
    %92 = vset.pattern.permute.xlu0 0
    %93 = vperm.xlu0 %92, %v89
    %v94 = vpop.permute.xlu0 %93
    %v96 = vlaneseq
    %v97 = vshrl.u32 %v96, 7
    %v98 = vsub.s32 0, %v97
    %v99 = vrot.slane %v90, %v98
    %v100 = vmul.f32 %v94, %v99
    %101 = vset.pattern.permute.xlu0 1
    %102 = vperm.xlu0 %101, %v89
    %v103 = vpop.permute.xlu0 %102
    %v105 = vlaneseq
    %v106 = vshrl.u32 %v105, 7
    %v107 = vsub.s32 1, %v106
    %v108 = vrot.slane %v90, %v107
    %v109 = vmul.f32 %v103, %v108
    %v110 = vadd.f32 %v100, %v109
    %111 = vset.pattern.permute.xlu0 2
    %112 = vperm.xlu0 %111, %v89
    %v113 = vpop.permute.xlu0 %112
    %v115 = vlaneseq
    %v116 = vshrl.u32 %v115, 7
    %v117 = vsub.s32 2, %v116
    %v118 = vrot.slane %v90, %v117
    %v119 = vmul.f32 %v113, %v118
    %v120 = vadd.f32 %v110, %v119
    %121 = vset.pattern.permute.xlu0 3
    %122 = vperm.xlu0 %121, %v89
    %v123 = vpop.permute.xlu0 %122
    %v125 = vlaneseq
    %v126 = vshrl.u32 %v125, 7
    %v127 = vsub.s32 3, %v126
    %v128 = vrot.slane %v90, %v127
    %v129 = vmul.f32 %v123, %v128
    %v130 = vadd.f32 %v120, %v129
    %v131 = vld [vmem:[#allocation2] sm:$0xf]
    %v132 = vmul.f32 %v88, %v130
    %v133 = vadd.f32 %v131, %v132
    %134 = vst [vmem:[#allocation2] sm:$0xf] %v133
    // Predicated region
    $region30: #{tpu_custom_call.1} parent=1 // pred_check
      %p135 = pneg %p80
    $region31: #{tpu_custom_call.1} parent=1 // pred_check_branch
      %137 = sbr.rel (%p135) target = $region33
    $region32: #{tpu_custom_call.1} parent=1 // pred_region
      %v138 = vld [vmem:[#allocation2] sm:$0xf]
      %vm139 = vcmask 1043456
      %v140 = vsel %vm139, %v138, 0.0
      %141 = vadd.xlane.f32.xlu0 %v140
      %v142 = vpop.xlane.xlu0 %141
      %v143 = vrot.slane %v142, 4
      %v144 = vadd.f32 %v142, %v143
      %v145 = vrot.slane %v144, 2
      %v146 = vadd.f32 %v144, %v145
      %v147 = vrot.slane %v146, 1
      %v148 = vadd.f32 %v146, %v147
      %s149 = vtos %v148
      %s150 = scalar_lea.smem [#allocation8], 0
      %151 = sst [smem:[%s150]] %s149
    $region33: #{tpu_custom_call.1} parent=1 // pred_fallthru
      _
    // Predicated region
    $region34: #{tpu_custom_call.1} parent=1 // pred_check
      _
    $region35: #{tpu_custom_call.1} parent=1 // pred_check_branch
      %153 = sbr.rel (0) target = $region37
    $region36: #{tpu_custom_call.1} parent=1 // pred_region
      %s155 = ssub.s32 16, 16
      %156 = vsyncadd [#allocation5], %s155
      %159 = dma.smem_to_hbm [#allocation8], 16, %s4, [#allocation5]
    $region37: #{tpu_custom_call.1} parent=1 // pred_fallthru
      _
    // Predicated region
    $region38: #{tpu_custom_call.1} parent=1 // pred_check
      _
    $region39: #{tpu_custom_call.1} parent=1 // pred_check_branch
      %161 = sbr.rel (0) target = $region41
    $region40: #{tpu_custom_call.1} parent=1 // pred_region
      %162 = dma.done [#allocation5], 16
    $region41: #{tpu_custom_call.1} parent=1 // pred_fallthru
      _
    %163 = sfence
    %164 = vsyncpa [#allocation4], 1
    %165 = vsyncpa [#allocation7], 1
    %166 = vsyncpa [#allocation5], 1

</llo_original>
